<compile_context>
chip_gen: v7x
topology: tpu7x:2x2x1
jax: 0.10.0
libtpu: 0.0.40
codegen_flags: <defaults>
</compile_context>

<pallas_src>
import jax
import jax.numpy as jnp
from jax import lax
from jax.experimental import pallas as pl
from jax.experimental.pallas import tpu as pltpu


_LANE_WIDTH = 1024                 # f32 lanes per output row (multiple of 128)
_RAYS_PER_ROW = _LANE_WIDTH // 2   # each ray contributes an (x, 0) pair
_BLOCK_ROWS_MAX = 512              # 512 x 1024 x 4 B = 2 MiB per output block
                                   # (double-buffered = 4 MiB, safe on v5e's
                                   # 16 MiB default scoped VMEM)


def _beam_kernel(params_ref, origins_ref):
    # params_ref: SMEM f32[2] = [start, step] of the linspace.
    start = params_ref[0]
    step = params_ref[1]

    br, w = origins_ref.shape            # (block_rows, _LANE_WIDTH)
    rays_per_row = w // 2
    half_step = step * 0.5               # exact (scale by power of two)

    # Scalar ray offset of this grid block (int32 scalar math; exact in f32
    # for num_rays < 2**24, same bound as a float32 torch.linspace anyway).
    base_ray = pl.program_id(0) * (br * rays_per_row)
    base_x = start + step * base_ray.astype(jnp.float32)

    # Flat element index inside the block (< 2**19 -> exact as f32).
    # Ray index within the block == flat // 2, so for even lanes
    #   x = base_x + step * (flat // 2) == base_x + half_step * flat   (exact).
    row_i = lax.broadcasted_iota(jnp.int32, (br, w), 0)
    lane_i = lax.broadcasted_iota(jnp.int32, (br, w), 1)
    flat = row_i * w + lane_i
    is_x_slot = (lane_i & 1) == 0        # even lanes hold x, odd lanes hold y=0

    x = base_x + half_step * flat.astype(jnp.float32)

    # Row-major flattened this is exactly [x0, 0, x1, 0, ...].
    origins_ref[...] = jnp.where(is_x_slot, x, jnp.float32(0.0))


def _pick_block_rows(num_rows: int) -> int:
    """~2 MiB blocks, multiple of 8, and >=2 grid steps when possible (v7x)."""
    if num_rows <= 8:
        return num_rows                      # full extent (allowed by Pallas)
    half = -(-num_rows // 2)                 # cdiv(num_rows, 2)
    half = -(-half // 8) * 8                 # round up to a multiple of 8
    return min(_BLOCK_ROWS_MAX, half)


def parallel_beam_uniform(radius: float, num_rays: int, *, min_kernel_rays: int = 65536):
    """Pallas equivalent of ParallelBeamUniform(radius).forward(num_rays)."""
    margin = 0.1
    start = float(-radius + margin)
    end = float(radius - margin)
    # torch.linspace semantics: one point -> start; else both endpoints included.
    step = (end - start) / (num_rays - 1) if num_rays > 1 else 0.0

    # vectors is a constant pattern: keep it out of the kernel so XLA can treat
    # it as a (fusable) broadcast instead of paying HBM writes from the kernel.
    vectors = jnp.broadcast_to(jnp.array([0.0, 1.0], dtype=jnp.float32),
                               (num_rays, 2))

    if num_rays < min_kernel_rays:
        # Small-N fast path: a fused XLA expression beats a kernel launch plus
        # a padded 1024-lane slab round trip for tiny outputs.
        x = jnp.linspace(start, end, num_rays, dtype=jnp.float32)
        origins = jnp.stack([x, jnp.zeros_like(x)], axis=-1)
        return origins, vectors

    params = jnp.array([start, step], dtype=jnp.float32)

    num_rows = pl.cdiv(num_rays, _RAYS_PER_ROW)
    block_rows = _pick_block_rows(num_rows)
    grid = (pl.cdiv(num_rows, block_rows),)

    origins_wide = pl.pallas_call(
        _beam_kernel,
        out_shape=jax.ShapeDtypeStruct((num_rows, _LANE_WIDTH), jnp.float32),
        grid=grid,
        in_specs=[
            pl.BlockSpec(memory_space=pltpu.MemorySpace.SMEM),  # [start, step]
        ],
        out_specs=pl.BlockSpec((block_rows, _LANE_WIDTH), lambda i: (i, 0)),
        compiler_params=pltpu.CompilerParams(
            dimension_semantics=("parallel",)),
    )(params)

    # Free reshape: (num_rows, 1024) row-major == (num_rows*512, 2) row-major.
    padded_rays = num_rows * _RAYS_PER_ROW
    origins = origins_wide.reshape(padded_rays, 2)
    if padded_rays != num_rays:
        # Only pay the copy when num_rays is not a multiple of 512.
        # TODO(synk): fuse ray generation into the downstream tracing kernel so
        # the padded slab never round-trips HBM and this slice disappears.
        origins = origins[:num_rays]
    return origins, vectors


if __name__ == "__main__":
    # Deterministic "inputs": radius drawn from PRNGKey(0).
    key = jax.random.PRNGKey(0)
    radius = float(jax.random.uniform(key, (), minval=5.0, maxval=10.0))
    margin = 0.1

    def reference(num_rays):
        x = jnp.linspace(-radius + margin, radius - margin, num_rays,
                         dtype=jnp.float32)
        ref_origins = jnp.stack([x, jnp.zeros_like(x)], axis=-1)
        ref_vectors = jnp.tile(jnp.array([0.0, 1.0], dtype=jnp.float32),
                               (num_rays, 1))
        return ref_origins, ref_vectors

    # (num_rays, min_kernel_rays) pairs:
    #   8, 1000   -> small-N fast path
    #   1000 (forced) -> kernel, grid=1, tiny block, ragged tail
    #   200_000   -> kernel, grid=2, partial (masked) last block rows + ragged tail
    #   524_288   -> kernel, grid=2, exact multiple of 512 (slice-free path)
    cases = [
        (8, 65536),
        (1000, 65536),
        (1000, 1),
        (200_000, 1),
        (524_288, 1),
    ]
    for num_rays, thresh in cases:
        origins, vectors = parallel_beam_uniform(radius, num_rays,
                                                 min_kernel_rays=thresh)
        jax.block_until_ready((origins, vectors))

        ref_origins, ref_vectors = reference(num_rays)
        assert origins.shape == (num_rays, 2) and vectors.shape == (num_rays, 2)
        assert jnp.allclose(origins, ref_origins, atol=1e-4, rtol=1e-5), num_rays
        assert jnp.allclose(vectors, ref_vectors), num_rays

    print("KERNEL_OK")
</pallas_src>

<mosaic_0001>
module attributes {stable_mosaic.version = 11 : i64} {
  func.func @_beam_kernel(%arg0: i32, %arg1: memref<2xf32, #tpu.memory_space<smem>>, %arg2: memref<2x1024xf32, #tpu.memory_space<vmem>>) attributes {dimension_semantics = [#tpu.dimension_semantics<parallel>], iteration_bounds = array<i64: 1>, scalar_prefetch = 0 : i64, scratch_operands = 0 : i64, tpu.core_type = #tpu.core_type<tc>, window_params = [{transform_indices = @transform_0, window_bounds = array<i64: 2>}, {transform_indices = @transform_1, window_bounds = array<i64: 2, 1024>}]} {
    %c0 = arith.constant 0 : index
    %0 = memref.load %arg1[%c0] : memref<2xf32, #tpu.memory_space<smem>>
    %c1 = arith.constant 1 : index
    %1 = memref.load %arg1[%c1] : memref<2xf32, #tpu.memory_space<smem>>
    %cst = arith.constant 5.000000e-01 : f32
    %2 = arith.mulf %1, %cst : f32
    %c1024_i32 = arith.constant 1024 : i32
    %3 = arith.muli %arg0, %c1024_i32 : i32
    %4 = arith.sitofp %3 : i32 to f32
    %5 = arith.mulf %1, %4 : f32
    %6 = arith.addf %0, %5 : f32
    %7 = tpu.iota {dimensions = array<i32: 0>} : vector<2x1024xi32>
    %8 = tpu.iota {dimensions = array<i32: 1>} : vector<2x1024xi32>
    %c1024_i32_0 = arith.constant 1024 : i32
    %9 = vector.broadcast %c1024_i32_0 : i32 to vector<2x1024xi32>
    %10 = arith.muli %7, %9 : vector<2x1024xi32>
    %11 = arith.addi %10, %8 : vector<2x1024xi32>
    %c1_i32 = arith.constant 1 : i32
    %12 = vector.broadcast %c1_i32 : i32 to vector<2x1024xi32>
    %13 = arith.andi %8, %12 : vector<2x1024xi32>
    %c0_i32 = arith.constant 0 : i32
    %14 = vector.broadcast %c0_i32 : i32 to vector<2x1024xi32>
    %15 = arith.cmpi eq, %13, %14 : vector<2x1024xi32>
    %16 = arith.sitofp %11 : vector<2x1024xi32> to vector<2x1024xf32>
    %17 = vector.broadcast %2 : f32 to vector<2x1024xf32>
    %18 = arith.mulf %17, %16 : vector<2x1024xf32>
    %19 = vector.broadcast %6 : f32 to vector<2x1024xf32>
    %20 = arith.addf %19, %18 : vector<2x1024xf32>
    %cst_1 = arith.constant 0.000000e+00 : f32
    %21 = vector.broadcast %cst_1 : f32 to vector<2x1024xf32>
    %22 = arith.select %15, %20, %21 : vector<2x1024xi1>, vector<2x1024xf32>
    %c0_2 = arith.constant 0 : index
    %c0_3 = arith.constant 0 : index
    %23 = vector.load %arg2[%c0_2, %c0_3] : memref<2x1024xf32, #tpu.memory_space<vmem>>, vector<2x1024xf32>
    tpu.vector_store %arg2[%c0_2, %c0_3], %22 {strides = array<i32>} : memref<2x1024xf32, #tpu.memory_space<vmem>>, vector<2x1024xf32>,
    return
  }
  func.func @transform_0(%arg0: i32) -> i32 {
    %c0_i32 = arith.constant 0 : i32
    %c0_i32_0 = arith.constant 0 : i32
    return %c0_i32 : i32
  }
  func.func @transform_1(%arg0: i32) -> (i32, i32) {
    %c0_i32 = arith.constant 0 : i32
    %c0_i32_0 = arith.constant 0 : i32
    return %arg0, %c0_i32 : i32, i32
  }
}

</mosaic_0001>

<llo_original>
// kernel: tpu_custom_call.1
$region0: #{tpu_custom_call.1}
  #allocation0 [shape = 'u32[]', space=smem, size = 0x4, offset = 0x4, fixed_abs, tag = 'smem constant byte address 0x4 - core index']
  #allocation1 [shape = 'u32[144,128]{1,0:T(1,128)}', space=vmem, size = 0x12000, scoped, tag = 'internal scratch']
  %s0 = inlined_call_operand.hbm [shape: f32[2], index: 0, kind: input, shape index: {}]
  %s1 = inlined_call_operand.hbm [shape: f32[2,1024], index: 1, kind: output, shape index: {}]
  %s2 = sld [smem:[#allocation0]]
  $region18: #{tpu_custom_call.1} parent=0
    _
  %s4 = ssub.s32 1, %s2
  %s5 = scalar_select 0, %s4, %s2
  $region1: #{tpu_custom_call.1} parent=0
    #allocation2 [shape = 'u8[512]{0}', space=smem, size = 0x200, scoped, tag = 'input window, operand 0, single buffered']
    #allocation3 [shape = 's32[1]{0}', space=sflag, size = 0x4, scoped, tag = 'scoped memory for tpu_custom_call.1']
    #allocation4 [shape = 's32[1]{0}', space=sflag, size = 0x4, scoped, tag = 'scoped memory for tpu_custom_call.1']
    #allocation5 [shape = 'u8[8192]{0}', space=vmem, size = 0x2000, scoped, tag = 'output window, operand 0, single buffered']
    %6 = vsyncpa [#allocation4], 0
    %7 = vsyncpa [#allocation3], 0
    // Predicated region
    $region2: #{tpu_custom_call.1} parent=1 // pred_check
      _
    $region3: #{tpu_custom_call.1} parent=1 // pred_check_branch
      %9 = sbr.rel (0) target = $region5
    $region4: #{tpu_custom_call.1} parent=1 // pred_region
      %s11 = ssub.s32 16, 16
      %12 = vsyncadd [#allocation4], %s11
      %15 = dma.hbm_to_smem %s0, 16, [#allocation2], [#allocation4]
    $region5: #{tpu_custom_call.1} parent=1 // pred_fallthru
      _
    // Predicated region
    $region6: #{tpu_custom_call.1} parent=1 // pred_check
      _
    $region7: #{tpu_custom_call.1} parent=1 // pred_check_branch
      %17 = sbr.rel (0) target = $region9
    $region8: #{tpu_custom_call.1} parent=1 // pred_region
      %18 = dma.done [#allocation4], 16
    $region9: #{tpu_custom_call.1} parent=1 // pred_fallthru
      _
    %19 = sfence
    %s20 = sld [smem:[#allocation2]]
    %s21 = sld [smem:[#allocation2 + $0x1]]
    %s22 = smul.f32 %s21, 0.5
    %s23 = smul.u32 0, 1024
    %s24 = scvt.s32.f32 %s23
    %s25 = smul.f32 %s21, %s24
    %s26 = sadd.f32 %s20, %s25
    %v27 = vlaneseq
    %v28 = vshrl.u32 %v27, 7
    %v29 = vlaneseq
    %v30 = vand.u32 %v29, 127
    %v31 = vadd.s32 %v30, 128
    %v32 = vadd.s32 %v30, 256
    %v33 = vadd.s32 %v30, 384
    %v34 = vadd.s32 %v30, 512
    %v35 = vadd.s32 %v30, 640
    %v36 = vadd.s32 %v30, 768
    %v37 = vadd.s32 %v30, 896
    %v38 = vmul.u32 %v28, 1024
    %v39 = vadd.s32 %v38, %v30
    %v40 = vadd.s32 %v38, %v31
    %v41 = vadd.s32 %v38, %v32
    %v42 = vadd.s32 %v38, %v33
    %v43 = vadd.s32 %v38, %v34
    %v44 = vadd.s32 %v38, %v35
    %v45 = vadd.s32 %v38, %v36
    %v46 = vadd.s32 %v38, %v37
    %v47 = vand.u32 %v30, 1
    %v48 = vand.u32 %v31, 1
    %v49 = vand.u32 %v32, 1
    %v50 = vand.u32 %v33, 1
    %v51 = vand.u32 %v34, 1
    %v52 = vand.u32 %v35, 1
    %v53 = vand.u32 %v36, 1
    %v54 = vand.u32 %v37, 1
    %vm55 = vcmp.eq.s32.totalorder %v47, 0
    %vm56 = vcmp.eq.s32.totalorder %v48, 0
    %vm57 = vcmp.eq.s32.totalorder %v49, 0
    %vm58 = vcmp.eq.s32.totalorder %v50, 0
    %vm59 = vcmp.eq.s32.totalorder %v51, 0
    %vm60 = vcmp.eq.s32.totalorder %v52, 0
    %vm61 = vcmp.eq.s32.totalorder %v53, 0
    %vm62 = vcmp.eq.s32.totalorder %v54, 0
    %v63 = vcvt.s32.f32 %v39
    %v64 = vcvt.s32.f32 %v40
    %v65 = vcvt.s32.f32 %v41
    %v66 = vcvt.s32.f32 %v42
    %v67 = vcvt.s32.f32 %v43
    %v68 = vcvt.s32.f32 %v44
    %v69 = vcvt.s32.f32 %v45
    %v70 = vcvt.s32.f32 %v46
    %v71 = vstv %s22
    %v72 = vmul.f32 %v71, %v63
    %v73 = vmul.f32 %v71, %v64
    %v74 = vmul.f32 %v71, %v65
    %v75 = vmul.f32 %v71, %v66
    %v76 = vmul.f32 %v71, %v67
    %v77 = vmul.f32 %v71, %v68
    %v78 = vmul.f32 %v71, %v69
    %v79 = vmul.f32 %v71, %v70
    %v80 = vstv %s26
    %v81 = vadd.f32 %v80, %v72
    %v82 = vadd.f32 %v80, %v73
    %v83 = vadd.f32 %v80, %v74
    %v84 = vadd.f32 %v80, %v75
    %v85 = vadd.f32 %v80, %v76
    %v86 = vadd.f32 %v80, %v77
    %v87 = vadd.f32 %v80, %v78
    %v88 = vadd.f32 %v80, %v79
    %v89 = vsel %vm55, %v81, 0.0
    %v90 = vsel %vm56, %v82, 0.0
    %v91 = vsel %vm57, %v83, 0.0
    %v92 = vsel %vm58, %v84, 0.0
    %v93 = vsel %vm59, %v85, 0.0
    %v94 = vsel %vm60, %v86, 0.0
    %v95 = vsel %vm61, %v87, 0.0
    %v96 = vsel %vm62, %v88, 0.0
    %v105 = vcombine.low %v89, %v90
    %v106 = vcombine.low %v91, %v92
    %v108 = vunpack.c.l.s4 1983009808
    %v109 = vunpack.c.0.s8 %v108
    %v110 = vlaneseq
    %v111 = vshrl.u32 %v110, 7
    %v112 = vsub.s32 %v109, %v111
    %v113 = vrot.slane %v105, %v112
    %v115 = vunpack.c.l.s4 1983009808
    %v116 = vunpack.c.0.s8 %v115
    %v117 = vlaneseq
    %v118 = vshrl.u32 %v117, 7
    %v119 = vsub.s32 %v116, %v118
    %v120 = vrot.slane %v106, %v119
    %v121 = vcombine.low %v113, %v120
    %v122 = vcombine.low %v93, %v94
    %v123 = vcombine.low %v95, %v96
    %v125 = vunpack.c.l.s4 1983009808
    %v126 = vunpack.c.0.s8 %v125
    %v127 = vlaneseq
    %v128 = vshrl.u32 %v127, 7
    %v129 = vsub.s32 %v126, %v128
    %v130 = vrot.slane %v122, %v129
    %v132 = vunpack.c.l.s4 1983009808
    %v133 = vunpack.c.0.s8 %v132
    %v134 = vlaneseq
    %v135 = vshrl.u32 %v134, 7
    %v136 = vsub.s32 %v133, %v135
    %v137 = vrot.slane %v123, %v136
    %v138 = vcombine.low %v130, %v137
    %141 = vst [vmem:[#allocation5] sm:$0xff] %v121
    %142 = vst [vmem:[#allocation5 + $0x8] sm:$0xff] %v138
    // Predicated region
    $region10: #{tpu_custom_call.1} parent=1 // pred_check
      _
    $region11: #{tpu_custom_call.1} parent=1 // pred_check_branch
      %144 = sbr.rel (0) target = $region13
    $region12: #{tpu_custom_call.1} parent=1 // pred_region
      %s146 = ssub.s32 256, 256
      %147 = vsyncadd [#allocation3], %s146
      %s149 = sshll.u32 [#allocation5], 4
      %s150 = int_to_ptr.vmem [resolvable:$true] %s149
      %152 = dma.vmem_to_hbm [thread:$0]  %s150, 256, %s1, [#allocation3]
    $region13: #{tpu_custom_call.1} parent=1 // pred_fallthru
      _
    // Predicated region
    $region14: #{tpu_custom_call.1} parent=1 // pred_check
      _
    $region15: #{tpu_custom_call.1} parent=1 // pred_check_branch
      %154 = sbr.rel (0) target = $region17
    $region16: #{tpu_custom_call.1} parent=1 // pred_region
      %155 = dma.done [#allocation3], 256
    $region17: #{tpu_custom_call.1} parent=1 // pred_fallthru
      _
    %156 = vsyncpa [#allocation3], 1
    %157 = vsyncpa [#allocation4], 1

</llo_original>
